<compile_context>
chip_gen: v7x
topology: tpu7x:2x2x1
jax: 0.10.0
libtpu: 0.0.40
codegen_flags: <defaults>
</compile_context>

<pallas_src>
import functools
import math

import jax
import jax.numpy as jnp
from jax import lax
from jax.experimental import pallas as pl
from jax.experimental.pallas import tpu as pltpu


def _round_up(x, m):
    return ((x + m - 1) // m) * m


# ---------------------------------------------------------------------------
# padding logic (replicates Unit3D.compute_pad / F.pad in forward)
# ---------------------------------------------------------------------------
def _compute_pad(dim_size, kernel, stride):
    if dim_size % stride == 0:
        return max(kernel - stride, 0)
    return max(kernel - dim_size % stride, 0)


def _unit3d_pad(x, kernel_shape, stride, padding):
    _, _, t, h, w = x.shape
    if padding == 'same':
        pad_t = _compute_pad(t, kernel_shape[0], stride[0])
        pad_h = _compute_pad(h, kernel_shape[1], stride[1])
        pad_w = _compute_pad(w, kernel_shape[2], stride[2])
    elif padding == 'spatial_valid':
        pad_t = _compute_pad(t, kernel_shape[0], stride[0])
        pad_h = 0
        pad_w = 0
    else:
        # Matches the PyTorch module: any other padding value -> no F.pad.
        pad_t = pad_h = pad_w = 0
    pads = [(0, 0), (0, 0),
            (pad_t // 2, pad_t - pad_t // 2),
            (pad_h // 2, pad_h - pad_h // 2),
            (pad_w // 2, pad_w - pad_w // 2)]
    if any(p != (0, 0) for p in pads):
        x = jnp.pad(x, pads)
    return x


# ---------------------------------------------------------------------------
# Pallas kernel: (Cout,tK) @ (tK,tS) on the MXU, f32 accumulation over the K
# grid axis, fused per-channel shift (bias / folded eval-BN) + ReLU epilogue.
# ---------------------------------------------------------------------------
def _make_unit3d_kernel(apply_relu, apply_shift, multi_k):
    def kernel(*refs):
        idx = 0
        w_ref = refs[idx]; idx += 1
        if apply_shift:
            shift_ref = refs[idx]; idx += 1
        else:
            shift_ref = None
        x_ref = refs[idx]; idx += 1
        o_ref = refs[idx]; idx += 1
        acc_ref = refs[idx] if multi_k else None

        def epilogue(acc):
            if apply_shift:
                acc = acc + shift_ref[...]          # (Cout,1) broadcast
            if apply_relu:
                acc = jnp.maximum(acc, 0.0)
            o_ref[0] = acc.astype(o_ref.dtype)       # bf16 (or f32) store

        # MXU matmul, f32 accumulation; weights were pre-scaled in the wrapper
        # so there is no per-element multiply in the epilogue.
        prod = jnp.dot(w_ref[...], x_ref[0], preferred_element_type=jnp.float32)

        if multi_k:
            k = pl.program_id(2)

            @pl.when(k == 0)
            def _():
                acc_ref[...] = prod

            @pl.when(k != 0)
            def _():
                acc_ref[...] = acc_ref[...] + prod

            @pl.when(k == pl.num_programs(2) - 1)
            def _():
                epilogue(acc_ref[...])
        else:
            epilogue(prod)

    return kernel


# ---------------------------------------------------------------------------
# wrapper
# ---------------------------------------------------------------------------
def unit3d_forward(x, weight, *, kernel_shape=(1, 1, 1), stride=(1, 1, 1),
                   padding='spatial_valid', bias=None, bn_params=None,
                   activation='relu', compute_dtype=jnp.bfloat16,
                   out_dtype=None, block_s=1024, block_k=512):
    """x: (B, Cin, T, H, W); weight: (Cout, Cin, KT, KH, KW) (PyTorch layout)."""
    if out_dtype is None:
        out_dtype = compute_dtype
    block_s = max(_round_up(block_s, 128), 128)
    block_k = max(_round_up(block_k, 128), 128)

    B, Cin = x.shape[0], x.shape[1]
    Cout = weight.shape[0]
    KT, KH, KW = kernel_shape
    ST, SH, SW = stride

    xp = _unit3d_pad(x, kernel_shape, stride, padding)
    _, _, Tp, Hp, Wp = xp.shape
    To = (Tp - KT) // ST + 1
    Ho = (Hp - KH) // SH + 1
    Wo = (Wp - KW) // SW + 1

    K = Cin * KT * KH * KW
    S = To * Ho * Wo

    # im2col (wrapper-side layout work). Tap order is (ci, kt, kh, kw) so it
    # matches weight.reshape(Cout, Cin*KT*KH*KW). For 1x1x1/stride-1 this is a
    # pure reshape (no data movement).
    taps = []
    for kt in range(KT):
        for kh in range(KH):
            for kw in range(KW):
                taps.append(lax.slice(
                    xp,
                    (0, 0, kt, kh, kw),
                    (B, Cin,
                     kt + (To - 1) * ST + 1,
                     kh + (Ho - 1) * SH + 1,
                     kw + (Wo - 1) * SW + 1),
                    (1, 1, ST, SH, SW)))              # (B, Cin, To, Ho, Wo)
    if len(taps) == 1:
        patches = taps[0].reshape(B, K, S)
    else:
        # TODO(synk): stream taps through an extra grid axis (reusing the K
        # accumulator) instead of materializing the KT*KH*KW-x im2col tensor
        # in HBM; kept wrapper-side here for simplicity.
        patches = jnp.stack(taps, axis=2).reshape(B, K, S)

    # Fold conv bias and eval-mode BatchNorm into (per-channel scale folded
    # into the weights in f32) + a single additive shift.
    w2d = weight.reshape(Cout, K).astype(jnp.float32)
    shift = None
    if bias is not None:
        shift = bias.astype(jnp.float32).reshape(Cout, 1)
    if bn_params is not None:
        # TODO(synk): training-mode BatchNorm3d (batch statistics) has no clean
        # single-pass equivalent here; eval-mode running-stats BN is folded.
        g = bn_params['gamma'].astype(jnp.float32).reshape(Cout, 1)
        bta = bn_params['beta'].astype(jnp.float32).reshape(Cout, 1)
        m = bn_params['mean'].astype(jnp.float32).reshape(Cout, 1)
        v = bn_params['var'].astype(jnp.float32).reshape(Cout, 1)
        eps = bn_params.get('eps', 1e-3)
        bn_scale = g * lax.rsqrt(v + eps)
        w2d = w2d * bn_scale                           # fold scale (f32)
        base = shift if shift is not None else jnp.zeros((Cout, 1), jnp.float32)
        shift = base * bn_scale + (bta - m * bn_scale)
    apply_shift = shift is not None
    apply_relu = (activation == 'relu')

    # ---- tiling --------------------------------------------------------
    # Spatial: lane-dense tiles (multiple of 128); tail block is partial and
    # its store is masked by Pallas -> no wrapper pad / post-call slice.
    tS = min(block_s, _round_up(S, 128))
    nS = pl.cdiv(S, tS)

    # Contraction: single step if K fits, otherwise 128-aligned K tiles with
    # an f32 accumulator across an "arbitrary" grid axis.
    if K <= block_k:
        tK, nK = K, 1
    else:
        tK = block_k
        for cand in range(block_k, 127, -128):         # prefer a divisor of K
            if K % cand == 0:
                tK = cand
                break
        nK = pl.cdiv(K, tK)
    Kp = tK * nK
    if Kp != K:
        # Zero-pad the contraction so padded weight columns x padded patch rows
        # contribute exactly 0 (cannot rely on garbage OOB reads in K).
        w2d = jnp.pad(w2d, ((0, 0), (0, Kp - K)))
        patches = jnp.pad(patches, ((0, 0), (0, Kp - K), (0, 0)))
    multi_k = nK > 1

    # dtype prep once in the wrapper (bf16 MXU operands, f32 accumulation).
    w2d = w2d.astype(compute_dtype)
    patches = patches.astype(compute_dtype)

    # ---- VMEM budget (raises v5e's 16 MiB default; capped below physical) --
    cbytes = jnp.dtype(compute_dtype).itemsize
    obytes = jnp.dtype(out_dtype).itemsize
    est = (2 * Cout * tK * cbytes            # double-buffered weight tile
           + 2 * tK * tS * cbytes            # double-buffered patch tile
           + 2 * Cout * tS * obytes          # double-buffered output tile
           + (Cout * tS * 4 if multi_k else 0)
           + 2 * Cout * 4)                   # shift
    vmem_limit = int(min(max(int(est * 1.5) + (2 << 20), 32 << 20), 100 << 20))
    try:
        cap = pltpu.get_tpu_info().vmem_capacity_bytes   # v7x: 64 MiB
        vmem_limit = min(vmem_limit, int(cap * 0.9))
    except Exception:
        pass

    # ---- pallas_call ----------------------------------------------------
    kernel = _make_unit3d_kernel(apply_relu, apply_shift, multi_k)

    in_specs = [pl.BlockSpec((Cout, tK), lambda b, s, k: (0, k))]
    args = [w2d]
    if apply_shift:
        in_specs.append(pl.BlockSpec((Cout, 1), lambda b, s, k: (0, 0)))
        args.append(shift)
    in_specs.append(pl.BlockSpec((1, tK, tS), lambda b, s, k: (b, k, s)))
    args.append(patches)

    scratch_shapes = [pltpu.VMEM((Cout, tS), jnp.float32)] if multi_k else []

    out = pl.pallas_call(
        kernel,
        out_shape=jax.ShapeDtypeStruct((B, Cout, S), out_dtype),
        grid_spec=pltpu.PrefetchScalarGridSpec(
            num_scalar_prefetch=0,
            grid=(B, nS, nK),
            in_specs=in_specs,
            out_specs=pl.BlockSpec((1, Cout, tS), lambda b, s, k: (b, 0, s)),
            scratch_shapes=scratch_shapes),
        compiler_params=pltpu.CompilerParams(
            dimension_semantics=("parallel", "parallel", "arbitrary"),
            vmem_limit_bytes=vmem_limit),
    )(*args)

    return out.reshape(B, Cout, To, Ho, Wo)


# ---------------------------------------------------------------------------
# pure-JAX reference (for sanity checking)
# ---------------------------------------------------------------------------
def unit3d_reference(x, weight, *, kernel_shape, stride, padding,
                     bias=None, bn_params=None, activation='relu'):
    xp = _unit3d_pad(x, kernel_shape, stride, padding)
    out = lax.conv_general_dilated(
        xp.astype(jnp.float32), weight.astype(jnp.float32),
        window_strides=stride, padding='VALID',
        dimension_numbers=('NCDHW', 'OIDHW', 'NCDHW'),
        precision=lax.Precision.HIGHEST)
    if bias is not None:
        out = out + bias.astype(jnp.float32).reshape(1, -1, 1, 1, 1)
    if bn_params is not None:
        g = bn_params['gamma'].astype(jnp.float32).reshape(1, -1, 1, 1, 1)
        bta = bn_params['beta'].astype(jnp.float32).reshape(1, -1, 1, 1, 1)
        m = bn_params['mean'].astype(jnp.float32).reshape(1, -1, 1, 1, 1)
        v = bn_params['var'].astype(jnp.float32).reshape(1, -1, 1, 1, 1)
        eps = bn_params.get('eps', 1e-3)
        out = (out - m) * (g * lax.rsqrt(v + eps)) + bta
    if activation == 'relu':
        out = jnp.maximum(out, 0.0)
    return out


if __name__ == "__main__":
    key = jax.random.PRNGKey(0)
    k1, k2, k3, k4, k5, k6, k7, k8 = jax.random.split(key, 8)

    # ---- Config A: Unit3D defaults -- 1x1x1 conv, stride 1, 'spatial_valid',
    # no bias, no batch norm, relu.  x: (B, Cin, T, H, W) ----
    B, Cin, Cout, T, H, W = 2, 4, 8, 8, 16, 16
    x = jax.random.normal(k1, (B, Cin, T, H, W), jnp.float32)
    w = jax.random.normal(k2, (Cout, Cin, 1, 1, 1), jnp.float32) / math.sqrt(Cin)

    ref_a = unit3d_reference(x, w, kernel_shape=(1, 1, 1), stride=(1, 1, 1),
                             padding='spatial_valid')

    # Production path: bf16 operands AND bf16 output (HBM-traffic cut).
    out_a = unit3d_forward(x, w)
    out_a = jax.block_until_ready(out_a)
    assert out_a.shape == (B, Cout, T, H, W), out_a.shape
    assert out_a.dtype == jnp.bfloat16
    out_a_f32 = out_a.astype(jnp.float32)
    assert bool(jnp.all(jnp.isfinite(out_a_f32)))
    assert bool(jnp.all(out_a_f32 >= 0.0))   # relu
    assert bool(jnp.allclose(out_a_f32, ref_a, atol=1e-1, rtol=1e-1))

    # f32 compute path vs lax.conv reference (tight structural check).
    out_a32 = unit3d_forward(x, w, compute_dtype=jnp.float32)
    assert out_a32.dtype == jnp.float32
    assert bool(jnp.allclose(out_a32, ref_a, atol=5e-2, rtol=5e-2))

    # ---- Config B: general path -- 3x3x3 kernel, stride (1,2,2), 'same'
    # padding, conv bias ----
    wb = jax.random.normal(k3, (Cout, Cin, 3, 3, 3), jnp.float32) / math.sqrt(Cin * 27)
    bb = jax.random.normal(k4, (Cout,), jnp.float32) * 0.1
    out_b = unit3d_forward(x, wb, kernel_shape=(3, 3, 3), stride=(1, 2, 2),
                           padding='same', bias=bb, compute_dtype=jnp.float32)
    ref_b = unit3d_reference(x, wb, kernel_shape=(3, 3, 3), stride=(1, 2, 2),
                             padding='same', bias=bb)
    out_b = jax.block_until_ready(out_b)
    assert out_b.shape == ref_b.shape == (B, Cout, 8, 8, 8), (out_b.shape, ref_b.shape)
    assert bool(jnp.allclose(out_b, ref_b, atol=5e-2, rtol=5e-2))

    # ---- Config C: exercises the K-tiled accumulator (nK>1), a partial
    # (masked) spatial tail block, conv bias and folded eval-mode BN ----
    B2, Cin2, Cout2, T2, H2, W2 = 2, 256, 16, 4, 9, 9
    x2 = jax.random.normal(k5, (B2, Cin2, T2, H2, W2), jnp.float32)
    w2 = jax.random.normal(k6, (Cout2, Cin2, 1, 1, 1), jnp.float32) / math.sqrt(Cin2)
    b2 = jax.random.normal(k7, (Cout2,), jnp.float32) * 0.1
    bn = dict(gamma=jax.random.normal(k8, (Cout2,), jnp.float32) * 0.1 + 1.0,
              beta=jnp.linspace(-0.2, 0.2, Cout2, dtype=jnp.float32),
              mean=jnp.linspace(-0.1, 0.1, Cout2, dtype=jnp.float32),
              var=jnp.linspace(0.5, 1.5, Cout2, dtype=jnp.float32),
              eps=1e-3)
    out_c = unit3d_forward(x2, w2, kernel_shape=(1, 1, 1), stride=(1, 1, 1),
                           padding='spatial_valid', bias=b2, bn_params=bn,
                           compute_dtype=jnp.float32, block_k=128)
    ref_c = unit3d_reference(x2, w2, kernel_shape=(1, 1, 1), stride=(1, 1, 1),
                             padding='spatial_valid', bias=b2, bn_params=bn)
    out_c = jax.block_until_ready(out_c)
    assert out_c.shape == ref_c.shape == (B2, Cout2, T2, H2, W2), (out_c.shape, ref_c.shape)
    assert bool(jnp.allclose(out_c, ref_c, atol=5e-2, rtol=5e-2))

    print("KERNEL_OK")
</pallas_src>

<mosaic_0001>
module attributes {stable_mosaic.version = 11 : i64} {
  func.func @kernel(%arg0: i32, %arg1: i32, %arg2: i32, %arg3: memref<8x4xbf16, #tpu.memory_space<vmem>>, %arg4: memref<1x4x1024xbf16, #tpu.memory_space<vmem>>, %arg5: memref<1x8x1024xbf16, #tpu.memory_space<vmem>>) attributes {dimension_semantics = [#tpu.dimension_semantics<parallel>, #tpu.dimension_semantics<parallel>, #tpu.dimension_semantics<arbitrary>], iteration_bounds = array<i64: 2, 2, 1>, scalar_prefetch = 0 : i64, scratch_operands = 0 : i64, tpu.core_type = #tpu.core_type<tc>, window_params = [{transform_indices = @transform_0, window_bounds = array<i64: 8, 4>}, {transform_indices = @transform_1, window_bounds = array<i64: 1, 4, 1024>}, {transform_indices = @transform_2, window_bounds = array<i64: 1, 8, 1024>}]} {
    %c0 = arith.constant 0 : index
    %c0_0 = arith.constant 0 : index
    %0 = vector.load %arg3[%c0, %c0_0] : memref<8x4xbf16, #tpu.memory_space<vmem>>, vector<8x4xbf16>
    %c0_1 = arith.constant 0 : index
    %c0_2 = arith.constant 0 : index
    %c0_3 = arith.constant 0 : index
    %1 = vector.load %arg4[%c0_1, %c0_2, %c0_3] : memref<1x4x1024xbf16, #tpu.memory_space<vmem>>, vector<1x4x1024xbf16>
    %2 = vector.shape_cast %1 : vector<1x4x1024xbf16> to vector<4x1024xbf16>
    %cst = arith.constant dense<0.000000e+00> : vector<8x1024xf32>
    %3 = tpu.matmul %0, %2, %cst {dimension_numbers = #tpu.dot_dimension_numbers<[1], [0], [0], [1], [0, 0, 1, 1], [], []>} : vector<8x4xbf16>, vector<4x1024xbf16>, vector<8x1024xf32> -> vector<8x1024xf32>
    %cst_4 = arith.constant 0.000000e+00 : f32
    %4 = vector.broadcast %cst_4 : f32 to vector<8x1024xf32>
    %5 = arith.maximumf %3, %4 : vector<8x1024xf32>
    %6 = arith.truncf %5 : vector<8x1024xf32> to vector<8x1024xbf16>
    %c0_5 = arith.constant 0 : index
    %c0_6 = arith.constant 0 : index
    %c0_7 = arith.constant 0 : index
    %7 = vector.load %arg5[%c0_5, %c0_6, %c0_7] : memref<1x8x1024xbf16, #tpu.memory_space<vmem>>, vector<1x8x1024xbf16>
    %8 = vector.shape_cast %7 : vector<1x8x1024xbf16> to vector<8x1024xbf16>
    %9 = vector.shape_cast %6 : vector<8x1024xbf16> to vector<1x8x1024xbf16>
    tpu.vector_store %arg5[%c0_5, %c0_6, %c0_7], %9 {strides = array<i32>} : memref<1x8x1024xbf16, #tpu.memory_space<vmem>>, vector<1x8x1024xbf16>,
    return
  }
  func.func @transform_0(%arg0: i32, %arg1: i32, %arg2: i32) -> (i32, i32) {
    %c0_i32 = arith.constant 0 : i32
    %c0_i32_0 = arith.constant 0 : i32
    return %c0_i32, %arg2 : i32, i32
  }
  func.func @transform_1(%arg0: i32, %arg1: i32, %arg2: i32) -> (i32, i32, i32) {
    %c0_i32 = arith.constant 0 : i32
    return %arg0, %arg2, %arg1 : i32, i32, i32
  }
  func.func @transform_2(%arg0: i32, %arg1: i32, %arg2: i32) -> (i32, i32, i32) {
    %c0_i32 = arith.constant 0 : i32
    %c0_i32_0 = arith.constant 0 : i32
    return %arg0, %c0_i32, %arg1 : i32, i32, i32
  }
}

</mosaic_0001>

<llo_original>
// kernel: tpu_custom_call.1
$region0: #{tpu_custom_call.1}
  #allocation0 [shape = 'u32[]', space=smem, size = 0x4, offset = 0x4, fixed_abs, tag = 'smem constant byte address 0x4 - core index']
  #allocation1 [shape = 'u32[144,128]{1,0:T(1,128)}', space=vmem, size = 0x12000, scoped, tag = 'internal scratch']
  %s0 = inlined_call_operand.vmem [shape: bf16[8,4], index: 0, kind: input, shape index: {}]
  %s1 = inlined_call_operand.hbm [shape: bf16[2,4,2048], index: 1, kind: input, shape index: {}]
  %s2 = inlined_call_operand.hbm [shape: bf16[2,8,2048], index: 2, kind: output, shape index: {}]
  %s3 = sld [smem:[#allocation0]]
  $region45: #{tpu_custom_call.1} parent=0
    _
  %s5 = ssub.s32 1, %s3
  %s6 = scalar_select 0, %s5, %s3
  $region1: #{tpu_custom_call.1} parent=0
    #allocation2 [shape = 'u8[16384]{0}', space=vmem, size = 0x4000, scoped, tag = 'input window, operand 1']
    #allocation3 [shape = 's32[2]{0}', space=sflag, size = 0x8, scoped, tag = 'scoped memory for tpu_custom_call.1']
    #allocation4 [shape = 's32[2]{0}', space=sflag, size = 0x8, scoped, tag = 'scoped memory for tpu_custom_call.1']
    #allocation5 [shape = 'u8[32768]{0}', space=vmem, size = 0x8000, scoped, tag = 'output window, operand 0']
    %7 = vsyncpa [#allocation3], 0
    %s8 = scalar_lea.sflag [#allocation3], 1
    %9 = vsyncpa %s8, 0
    %10 = vsyncpa [#allocation4], 0
    %s11 = scalar_lea.sflag [#allocation4], 1
    %12 = vsyncpa %s11, 0
    loop: start=0, step=1, limit=6
    $region2: #{tpu_custom_call.1} parent=1 // loop_pre_header
      _
    $region3: #{tpu_custom_call.1} parent=1 // loop_header
      %s14 = sphi 0, %s18
      %p15 = scmp.ge.s32.totalorder %s14, 6
      %s21 = sphi 0, %s40
      %s22 = sphi 0, %s36
      %s23 = sphi 0, %s32
      %s24 = sphi 0, %s21
      %s25 = sphi 0, %s22
      %s26 = sphi 0, %s23
      %s27 = sphi 0, %s24
      %s28 = sphi 0, %s25
      %s29 = sphi 0, %s26
      %s43 = sphi 0, %s45
      %s46 = sphi 0, %s43
      %s47 = sphi 0, %s46
      %s63 = sphi 0, %s47
      %s73 = sphi 0, %s75
      %s76 = sphi 0, %s73
      %s77 = sphi 0, %s76
      %s93 = sphi 0, %s77
      %s101 = sphi 0, %s103
      %s104 = sphi 0, %s101
      %s105 = sphi 0, %s104
      %s121 = sphi 0, %s105
    $region4: #{tpu_custom_call.1} parent=1 // loop_header_branch
      %17 = sbr.rel (%p15) target = $region8
    $region5: #{tpu_custom_call.1} parent=1 // loop_body
      %s19 = ssub.s32 %s14, 1
      %s20 = ssub.s32 %s14, 2
      %s30 = sadd.s32 1, %s23
      %p31 = scmp.ge.s32.totalorder %s30, 1
      %s32 = scalar_select %p31, 0, %s30
      %s33 = sadd.s32 1, %s22
      %s34 = scalar_select %p31, %s33, %s22
      %p35 = scmp.ge.s32.totalorder %s34, 2
      %s36 = scalar_select %p35, 0, %s34
      %s37 = sadd.s32 1, %s21
      %s38 = scalar_select %p35, %s37, %s21
      %p39 = scmp.ge.s32.totalorder %s38, 2
      %s40 = scalar_select %p39, 0, %s38
      %s41 = ssub.s32 %s23, %s32
      %p42 = scmp.eq.s32.totalorder %s41, 0
      %s44 = sadd.s32 %s43, 1
      %s45 = scalar_select %p42, %s43, %s44
      %p48 = pneg %p42
      %p49 = scmp.eq.s32.totalorder %s14, 3
      %p50 = por %p48, %p49
      %p51 = scmp.ne.s32.totalorder %s43, %s46
      %p52 = scmp.eq.s32.totalorder %s14, 0
      %p53 = por %p51, %p52
      %p54 = scmp.ne.s32.totalorder %s43, %s46
      %p55 = scmp.eq.s32.totalorder %s19, 3
      %p56 = por %p54, %p55
      %p57 = scmp.ne.s32.totalorder %s46, %s47
      %p58 = scmp.eq.s32.totalorder %s19, 0
      %p59 = por %p57, %p58
      %p60 = scmp.ne.s32.totalorder %s46, %s47
      %p61 = scmp.eq.s32.totalorder %s20, 3
      %p62 = por %p60, %p61
      %p64 = scmp.ne.s32.totalorder %s47, %s63
      %p65 = scmp.eq.s32.totalorder %s20, 0
      %p66 = por %p64, %p65
      %s67 = ssub.s32 %s21, %s40
      %s68 = ssub.s32 %s23, %s32
      %s69 = sor.u32 %s67, %s68
      %s70 = ssub.s32 %s22, %s36
      %s71 = sor.u32 %s69, %s70
      %p72 = scmp.eq.s32.totalorder %s71, 0
      %s74 = sadd.s32 %s73, 1
      %s75 = scalar_select %p72, %s73, %s74
      %p78 = pneg %p72
      %p79 = scmp.eq.s32.totalorder %s14, 3
      %p80 = por %p78, %p79
      %p81 = scmp.ne.s32.totalorder %s73, %s76
      %p82 = scmp.eq.s32.totalorder %s14, 0
      %p83 = por %p81, %p82
      %p84 = scmp.ne.s32.totalorder %s73, %s76
      %p85 = scmp.eq.s32.totalorder %s19, 3
      %p86 = por %p84, %p85
      %p87 = scmp.ne.s32.totalorder %s76, %s77
      %p88 = scmp.eq.s32.totalorder %s19, 0
      %p89 = por %p87, %p88
      %p90 = scmp.ne.s32.totalorder %s76, %s77
      %p91 = scmp.eq.s32.totalorder %s20, 3
      %p92 = por %p90, %p91
      %p94 = scmp.ne.s32.totalorder %s77, %s93
      %p95 = scmp.eq.s32.totalorder %s20, 0
      %p96 = por %p94, %p95
      %s97 = ssub.s32 %s21, %s40
      %s98 = ssub.s32 %s22, %s36
      %s99 = sor.u32 %s97, %s98
      %p100 = scmp.eq.s32.totalorder %s99, 0
      %s102 = sadd.s32 %s101, 1
      %s103 = scalar_select %p100, %s101, %s102
      %p106 = pneg %p100
      %p107 = scmp.eq.s32.totalorder %s14, 3
      %p108 = por %p106, %p107
      %p109 = scmp.ne.s32.totalorder %s101, %s104
      %p110 = scmp.eq.s32.totalorder %s14, 0
      %p111 = por %p109, %p110
      %p112 = scmp.ne.s32.totalorder %s101, %s104
      %p113 = scmp.eq.s32.totalorder %s19, 3
      %p114 = por %p112, %p113
      %p115 = scmp.ne.s32.totalorder %s104, %s105
      %p116 = scmp.eq.s32.totalorder %s19, 0
      %p117 = por %p115, %p116
      %p118 = scmp.ne.s32.totalorder %s104, %s105
      %p119 = scmp.eq.s32.totalorder %s20, 3
      %p120 = por %p118, %p119
      %p122 = scmp.ne.s32.totalorder %s105, %s121
      %p123 = scmp.eq.s32.totalorder %s20, 0
      %p124 = por %p122, %p123
      %p125 = scmp.le.s32.totalorder 1, %s14
      %p126 = scmp.lt.s32.totalorder %s14, 5
      %p127 = pnand %p125, %p126
      %p128 = pneg %p127
      // Predicated region
      $region9: #{tpu_custom_call.1} parent=5 // pred_check
        _
      $region10: #{tpu_custom_call.1} parent=5 // pred_check_branch
        %130 = sbr.rel (%p127) target = $region12
      $region11: #{tpu_custom_call.1} parent=5 // pred_region
        %s131 = ssub.s32 %s14, 1
        // Predicated region
        $region13: #{tpu_custom_call.1} parent=11 // pred_check
          %p132 = pneg %p59
        $region14: #{tpu_custom_call.1} parent=11 // pred_check_branch
          %134 = sbr.rel (%p132) target = $region16
        $region15: #{tpu_custom_call.1} parent=11 // pred_region
          %p135 = scmp.lt.s32.totalorder %s26, 0
          %s136 = scalar_select %p135, %s26, 0
          %s137 = smul.addr %s136, 4
          %s138 = scalar_lea.vmem %s0, %s137
        $region16: #{tpu_custom_call.1} parent=11 // pred_fallthru
          _
      $region12: #{tpu_custom_call.1} parent=5 // pred_fallthru
        _
      %p139 = scmp.lt.s32.totalorder %s14, 4
      // Predicated region
      $region17: #{tpu_custom_call.1} parent=5 // pred_check
        %p140 = pneg %p139
      $region18: #{tpu_custom_call.1} parent=5 // pred_check_branch
        %142 = sbr.rel (%p140) target = $region20
      $region19: #{tpu_custom_call.1} parent=5 // pred_region
        // Predicated region
        $region21: #{tpu_custom_call.1} parent=19 // pred_check
          %p143 = pneg %p83
        $region22: #{tpu_custom_call.1} parent=19 // pred_check_branch
          %145 = sbr.rel (%p143) target = $region24
        $region23: #{tpu_custom_call.1} parent=19 // pred_region
          %s146 = sand.u32 %s73, 1
          %s147 = scalar_lea.sflag [#allocation3], %s146
          %s148 = sand.u32 %s73, 1
          %s149 = smul.addr %s148, 16
          %s150 = scalar_lea.vmem [#allocation2], %s149
          %s151 = smul.u32 8, %s22
          %s153 = ssub.s32 256, 256
          %154 = vsyncadd %s147, %s153
          %s155 = smul.addr %s23, 16
          %s156 = sadd.s32 %s151, %s155
          %s157 = smul.addr %s21, 16
          %s158 = sadd.s32 %s156, %s157
          %s159 = smul.addr %s158, 32
          %s160 = scalar_lea.hbm %s1, %s159
          %s162 = sshll.u32 %s150, 4
          %s163 = int_to_ptr.vmem [resolvable:$true] %s162
          %165 = dma.hbm_to_vmem [thread:$0]  %s160, 256, %s163, %s147
        $region24: #{tpu_custom_call.1} parent=19 // pred_fallthru
          _
      $region20: #{tpu_custom_call.1} parent=5 // pred_fallthru
        _
      %p166 = scmp.le.s32.totalorder 1, %s14
      %p167 = scmp.lt.s32.totalorder %s14, 5
      %p168 = pnand %p166, %p167
      %p169 = pneg %p168
      // Predicated region
      $region25: #{tpu_custom_call.1} parent=5 // pred_check
        _
      $region26: #{tpu_custom_call.1} parent=5 // pred_check_branch
        %171 = sbr.rel (%p168) target = $region28
      $region27: #{tpu_custom_call.1} parent=5 // pred_region
        %s172 = ssub.s32 %s14, 1
        %s173 = sand.u32 %s76, 1
        %s174 = scalar_lea.sflag [#allocation3], %s173
        %s175 = sand.u32 %s76, 1
        %s176 = smul.addr %s175, 16
        %s177 = scalar_lea.vmem [#allocation2], %s176
        // Predicated region
        $region29: #{tpu_custom_call.1} parent=27 // pred_check
          %p178 = pneg %p89
        $region30: #{tpu_custom_call.1} parent=27 // pred_check_branch
          %180 = sbr.rel (%p178) target = $region32
        $region31: #{tpu_custom_call.1} parent=27 // pred_region
          %181 = dma.done %s174, 256
        $region32: #{tpu_custom_call.1} parent=27 // pred_fallthru
          _
        %p182 = scmp.lt.s32.totalorder %s26, 0
        %s183 = scalar_select %p182, %s26, 0
        %s184 = smul.addr %s183, 4
        %s185 = scalar_lea.vmem %s0, %s184
        %p186 = pneg %p59
        %p187 = pneg %p56
        %s188 = sand.u32 %s76, 1
        %s189 = scalar_lea.sflag [#allocation3], %s188
        %s190 = sand.u32 %s76, 1
        %s191 = smul.addr %s190, 16
        %s192 = scalar_lea.vmem [#allocation2], %s191
        %p193 = pneg %p89
        %p194 = pneg %p86
        %p195 = pneg %p117
        %p196 = pneg %p114
        %s197 = sand.u32 %s104, 1
        %s198 = scalar_lea.sflag [#allocation4], %s197
        %s199 = sand.u32 %s104, 1
        %s200 = smul.addr %s199, 32
        %s201 = scalar_lea.vmem [#allocation5], %s200
        %p202 = scmp.lt.s32.totalorder %s26, 0
        %s203 = scalar_select %p202, %s26, 0
        %s204 = smul.addr %s203, 4
        %s205 = scalar_lea.vmem %s0, %s204
        %s206 = smul.u32 8, %s25
        %s207 = smul.u32 8, %s25
        %v209 = vld [vmem:[%s205] sm:$0xf]
        %v210 = vld [vmem:[%s177] sm:$0xff]
        %v211 = vld [vmem:[%s177 + $0x8] sm:$0xff]
        %v214 = vcombine.high %v210, %v210
        %v216 = vunpack.c.l.s4 1983009808
        %v217 = vunpack.c.0.s8 %v216
        %v218 = vlaneseq
        %v219 = vshrl.u32 %v218, 7
        %v220 = vsub.s32 %v217, %v219
        %v221 = vrot.slane %v210, %v220
        %v223 = vunpack.c.l.s4 1983009808
        %v224 = vunpack.c.0.s8 %v223
        %v225 = vlaneseq
        %v226 = vshrl.u32 %v225, 7
        %v227 = vsub.s32 %v224, %v226
        %v228 = vrot.slane %v214, %v227
        %v229 = vcombine.high %v221, %v221
        %v230 = vcombine.high %v228, %v228
        %v231 = vcombine.high %v211, %v211
        %v233 = vunpack.c.l.s4 1983009808
        %v234 = vunpack.c.0.s8 %v233
        %v235 = vlaneseq
        %v236 = vshrl.u32 %v235, 7
        %v237 = vsub.s32 %v234, %v236
        %v238 = vrot.slane %v211, %v237
        %v240 = vunpack.c.l.s4 1983009808
        %v241 = vunpack.c.0.s8 %v240
        %v242 = vlaneseq
        %v243 = vshrl.u32 %v242, 7
        %v244 = vsub.s32 %v241, %v243
        %v245 = vrot.slane %v231, %v244
        %v246 = vcombine.high %v238, %v238
        %v247 = vcombine.high %v245, %v245
        %vm248 = vcmask 31744
        %v250 = vsel %vm248, %v209, 0
        %vm252 = vcmask 1041408
        %v254 = vsel %vm252, %v221, 0
        %v257 = vsel %vm252, %v229, 0
        %v260 = vsel %vm252, %v228, 0
        %v263 = vsel %vm252, %v230, 0
        %v266 = vsel %vm252, %v238, 0
        %v269 = vsel %vm252, %v246, 0
        %v272 = vsel %vm252, %v245, 0
        %v275 = vsel %vm252, %v247, 0
        %277 = vmatprep.subr.bf16.mxu0 %v257
        %278 = vmatpush1.bf16.msra.mxu0 %v254
        %279 = vmatprep.subr.bf16.mxu0 0
        %280 = vmatpush1.bf16.msra.mxu0 0
        %281 = vmatprep.subr.bf16.mxu0 0
        %282 = vmatpush1.bf16.msra.mxu0 0
        %283 = vmatprep.subr.bf16.mxu0 0
        %284 = vmatpush1.bf16.msra.mxu0 0
        %285 = vmatprep.subr.bf16.mxu0 0
        %286 = vmatpush1.bf16.msra.mxu0 0
        %287 = vmatprep.subr.bf16.mxu0 0
        %288 = vmatpush1.bf16.msra.mxu0 0
        %289 = vmatprep.subr.bf16.mxu0 0
        %290 = vmatpush1.bf16.msra.mxu0 0
        %291 = vmatprep.subr.bf16.mxu0 0
        %292 = vmatpush1.bf16.msra.mxu0 0
        %293 = vmatprep.subr.bf16.mxu0 0
        %294 = vmatpush1.bf16.msra.mxu0 0
        %295 = vmatprep.subr.bf16.mxu0 0
        %296 = vmatpush1.bf16.msra.mxu0 0
        %297 = vmatprep.subr.bf16.mxu0 0
        %298 = vmatpush1.bf16.msra.mxu0 0
        %299 = vmatprep.subr.bf16.mxu0 0
        %300 = vmatpush1.bf16.msra.mxu0 0
        %301 = vmatprep.subr.bf16.mxu0 0
        %302 = vmatpush1.bf16.msra.mxu0 0
        %303 = vmatprep.subr.bf16.mxu0 0
        %304 = vmatpush1.bf16.msra.mxu0 0
        %305 = vmatprep.subr.bf16.mxu0 0
        %306 = vmatpush1.bf16.msra.mxu0 0
        %307 = vmatprep.subr.bf16.mxu0 0
        %308 = vmatpush1.bf16.msra.mxu0 0
        %309 = vmatprep.mubr.bf16.mxu0 0
        %310 = vmatmul.mubr.bf16.gmra.mrb[0].mxu0 %v250
        %v311 = vpop.f32.mrb[0].mxu0
        %v312 = vadd.f32 0.0, %v311
        %v313 = vpop.f32.mrb[0].mxu0
        %v314 = vadd.f32 0.0, %v313
        %v315 = vpop.f32.mrb[0].mxu0
        %v316 = vpop.f32.mrb[0].mxu0
        %317 = vdwg.mxu0
        %318 = vmatprep.subr.bf16.mxu0 %v263
        %319 = vmatpush1.bf16.msra.mxu0 %v260
        %320 = vmatprep.subr.bf16.mxu0 0
        %321 = vmatpush1.bf16.msra.mxu0 0
        %322 = vmatprep.subr.bf16.mxu0 0
        %323 = vmatpush1.bf16.msra.mxu0 0
        %324 = vmatprep.subr.bf16.mxu0 0
        %325 = vmatpush1.bf16.msra.mxu0 0
        %326 = vmatprep.subr.bf16.mxu0 0
        %327 = vmatpush1.bf16.msra.mxu0 0
        %328 = vmatprep.subr.bf16.mxu0 0
        %329 = vmatpush1.bf16.msra.mxu0 0
        %330 = vmatprep.subr.bf16.mxu0 0
        %331 = vmatpush1.bf16.msra.mxu0 0
        %332 = vmatprep.subr.bf16.mxu0 0
        %333 = vmatpush1.bf16.msra.mxu0 0
        %334 = vmatprep.subr.bf16.mxu0 0
        %335 = vmatpush1.bf16.msra.mxu0 0
        %336 = vmatprep.subr.bf16.mxu0 0
        %337 = vmatpush1.bf16.msra.mxu0 0
        %338 = vmatprep.subr.bf16.mxu0 0
        %339 = vmatpush1.bf16.msra.mxu0 0
        %340 = vmatprep.subr.bf16.mxu0 0
        %341 = vmatpush1.bf16.msra.mxu0 0
        %342 = vmatprep.subr.bf16.mxu0 0
        %343 = vmatpush1.bf16.msra.mxu0 0
        %344 = vmatprep.subr.bf16.mxu0 0
        %345 = vmatpush1.bf16.msra.mxu0 0
        %346 = vmatprep.subr.bf16.mxu0 0
        %347 = vmatpush1.bf16.msra.mxu0 0
        %348 = vmatprep.subr.bf16.mxu0 0
        %349 = vmatpush1.bf16.msra.mxu0 0
        %350 = vmatprep.mubr.bf16.mxu0 0
        %351 = vmatmul.mubr.bf16.gmra.mrb[0].mxu0 %v250
        %v352 = vpop.f32.mrb[0].mxu0
        %v353 = vadd.f32 0.0, %v352
        %v354 = vpop.f32.mrb[0].mxu0
        %v355 = vadd.f32 0.0, %v354
        %v356 = vpop.f32.mrb[0].mxu0
        %v357 = vpop.f32.mrb[0].mxu0
        %358 = vdwg.mxu0
        %359 = vmatprep.subr.bf16.mxu0 %v269
        %360 = vmatpush1.bf16.msra.mxu0 %v266
        %361 = vmatprep.subr.bf16.mxu0 0
        %362 = vmatpush1.bf16.msra.mxu0 0
        %363 = vmatprep.subr.bf16.mxu0 0
        %364 = vmatpush1.bf16.msra.mxu0 0
        %365 = vmatprep.subr.bf16.mxu0 0
        %366 = vmatpush1.bf16.msra.mxu0 0
        %367 = vmatprep.subr.bf16.mxu0 0
        %368 = vmatpush1.bf16.msra.mxu0 0
        %369 = vmatprep.subr.bf16.mxu0 0
        %370 = vmatpush1.bf16.msra.mxu0 0
        %371 = vmatprep.subr.bf16.mxu0 0
        %372 = vmatpush1.bf16.msra.mxu0 0
        %373 = vmatprep.subr.bf16.mxu0 0
        %374 = vmatpush1.bf16.msra.mxu0 0
        %375 = vmatprep.subr.bf16.mxu0 0
        %376 = vmatpush1.bf16.msra.mxu0 0
        %377 = vmatprep.subr.bf16.mxu0 0
        %378 = vmatpush1.bf16.msra.mxu0 0
        %379 = vmatprep.subr.bf16.mxu0 0
        %380 = vmatpush1.bf16.msra.mxu0 0
        %381 = vmatprep.subr.bf16.mxu0 0
        %382 = vmatpush1.bf16.msra.mxu0 0
        %383 = vmatprep.subr.bf16.mxu0 0
        %384 = vmatpush1.bf16.msra.mxu0 0
        %385 = vmatprep.subr.bf16.mxu0 0
        %386 = vmatpush1.bf16.msra.mxu0 0
        %387 = vmatprep.subr.bf16.mxu0 0
        %388 = vmatpush1.bf16.msra.mxu0 0
        %389 = vmatprep.subr.bf16.mxu0 0
        %390 = vmatpush1.bf16.msra.mxu0 0
        %391 = vmatprep.mubr.bf16.mxu0 0
        %392 = vmatmul.mubr.bf16.gmra.mrb[0].mxu0 %v250
        %v393 = vpop.f32.mrb[0].mxu0
        %v394 = vadd.f32 0.0, %v393
        %v395 = vpop.f32.mrb[0].mxu0
        %v396 = vadd.f32 0.0, %v395
        %v397 = vpop.f32.mrb[0].mxu0
        %v398 = vpop.f32.mrb[0].mxu0
        %399 = vdwg.mxu0
        %400 = vmatprep.subr.bf16.mxu0 %v275
        %401 = vmatpush1.bf16.msra.mxu0 %v272
        %402 = vmatprep.subr.bf16.mxu0 0
        %403 = vmatpush1.bf16.msra.mxu0 0
        %404 = vmatprep.subr.bf16.mxu0 0
        %405 = vmatpush1.bf16.msra.mxu0 0
        %406 = vmatprep.subr.bf16.mxu0 0
        %407 = vmatpush1.bf16.msra.mxu0 0
        %408 = vmatprep.subr.bf16.mxu0 0
        %409 = vmatpush1.bf16.msra.mxu0 0
        %410 = vmatprep.subr.bf16.mxu0 0
        %411 = vmatpush1.bf16.msra.mxu0 0
        %412 = vmatprep.subr.bf16.mxu0 0
        %413 = vmatpush1.bf16.msra.mxu0 0
        %414 = vmatprep.subr.bf16.mxu0 0
        %415 = vmatpush1.bf16.msra.mxu0 0
        %416 = vmatprep.subr.bf16.mxu0 0
        %417 = vmatpush1.bf16.msra.mxu0 0
        %418 = vmatprep.subr.bf16.mxu0 0
        %419 = vmatpush1.bf16.msra.mxu0 0
        %420 = vmatprep.subr.bf16.mxu0 0
        %421 = vmatpush1.bf16.msra.mxu0 0
        %422 = vmatprep.subr.bf16.mxu0 0
        %423 = vmatpush1.bf16.msra.mxu0 0
        %424 = vmatprep.subr.bf16.mxu0 0
        %425 = vmatpush1.bf16.msra.mxu0 0
        %426 = vmatprep.subr.bf16.mxu0 0
        %427 = vmatpush1.bf16.msra.mxu0 0
        %428 = vmatprep.subr.bf16.mxu0 0
        %429 = vmatpush1.bf16.msra.mxu0 0
        %430 = vmatprep.subr.bf16.mxu0 0
        %431 = vmatpush1.bf16.msra.mxu0 0
        %432 = vmatprep.mubr.bf16.mxu0 0
        %433 = vmatmul.mubr.bf16.gmra.mrb[0].mxu0 %v250
        %v434 = vpop.f32.mrb[0].mxu0
        %v435 = vadd.f32 0.0, %v434
        %v436 = vpop.f32.mrb[0].mxu0
        %v437 = vadd.f32 0.0, %v436
        %v438 = vpop.f32.mrb[0].mxu0
        %v439 = vpop.f32.mrb[0].mxu0
        %440 = vdwg.mxu0
        %v441 = vmax.f32 %v312, 0.0
        %v442 = vmax.f32 %v314, 0.0
        %v443 = vmax.f32 %v353, 0.0
        %v444 = vmax.f32 %v355, 0.0
        %v445 = vmax.f32 %v394, 0.0
        %v446 = vmax.f32 %v396, 0.0
        %v447 = vmax.f32 %v435, 0.0
        %v448 = vmax.f32 %v437, 0.0
        %v449 = vpack.c.bf16 %v441, %v441
        %v450 = vpack.c.bf16 %v442, %v442
        %v451 = vpack.c.bf16 %v443, %v443
        %v452 = vpack.c.bf16 %v444, %v444
        %v453 = vpack.c.bf16 %v445, %v445
        %v454 = vpack.c.bf16 %v446, %v446
        %v455 = vpack.c.bf16 %v447, %v447
        %v456 = vpack.c.bf16 %v448, %v448
        %v465 = vunpack.c.l.b16 %v449
        %v466 = vunpack.c.l.b16 %v450
        %v467 = vunpack.c.l.b16 %v451
        %v468 = vunpack.c.l.b16 %v452
        %v469 = vunpack.c.l.b16 %v453
        %v470 = vunpack.c.l.b16 %v454
        %v471 = vunpack.c.l.b16 %v455
        %v472 = vunpack.c.l.b16 %v456
        %v473 = vpack.c.b16 %v466, %v465
        %v474 = vpack.c.b16 %v468, %v467
        %v475 = vpack.c.b16 %v470, %v469
        %v476 = vpack.c.b16 %v472, %v471
        %481 = vst [vmem:[%s201] sm:$0xff] %v473
        %482 = vst [vmem:[%s201 + $0x8] sm:$0xff] %v474
        %483 = vst [vmem:[%s201 + $0x10] sm:$0xff] %v475
        %484 = vst [vmem:[%s201 + $0x18] sm:$0xff] %v476
        %s485 = sand.u32 %s104, 1
        %s486 = scalar_lea.sflag [#allocation4], %s485
        %s487 = sand.u32 %s104, 1
        %s488 = smul.addr %s487, 32
        %s489 = scalar_lea.vmem [#allocation5], %s488
        // Predicated region
        $region33: #{tpu_custom_call.1} parent=27 // pred_check
          %p490 = pneg %p114
        $region34: #{tpu_custom_call.1} parent=27 // pred_check_branch
          %492 = sbr.rel (%p490) target = $region36
        $region35: #{tpu_custom_call.1} parent=27 // pred_region
          %s493 = smul.u32 8, %s25
          %s495 = ssub.s32 512, 512
          %496 = vsyncadd %s486, %s495
          %s497 = smul.addr %s24, 16
          %s498 = sadd.s32 %s493, %s497
          %s499 = smul.addr %s498, 64
          %s500 = scalar_lea.hbm %s2, %s499
          %s502 = sshll.u32 %s489, 4
          %s503 = int_to_ptr.vmem [resolvable:$true] %s502
          %505 = dma.vmem_to_hbm [thread:$0]  %s503, 512, %s500, %s486
        $region36: #{tpu_custom_call.1} parent=27 // pred_fallthru
          _
      $region28: #{tpu_custom_call.1} parent=5 // pred_fallthru
        _
      %p506 = scmp.le.s32.totalorder 2, %s14
      // Predicated region
      $region37: #{tpu_custom_call.1} parent=5 // pred_check
        %p507 = pneg %p506
      $region38: #{tpu_custom_call.1} parent=5 // pred_check_branch
        %509 = sbr.rel (%p507) target = $region40
      $region39: #{tpu_custom_call.1} parent=5 // pred_region
        %s510 = ssub.s32 %s14, 2
        // Predicated region
        $region41: #{tpu_custom_call.1} parent=39 // pred_check
          %p511 = pneg %p120
        $region42: #{tpu_custom_call.1} parent=39 // pred_check_branch
          %513 = sbr.rel (%p511) target = $region44
        $region43: #{tpu_custom_call.1} parent=39 // pred_region
          %s514 = sand.u32 %s105, 1
          %s515 = scalar_lea.sflag [#allocation4], %s514
          %s516 = sand.u32 %s105, 1
          %s517 = smul.addr %s516, 32
          %s518 = scalar_lea.vmem [#allocation5], %s517
          %519 = dma.done %s515, 512
        $region44: #{tpu_custom_call.1} parent=39 // pred_fallthru
          _
      $region40: #{tpu_custom_call.1} parent=5 // pred_fallthru
        _
    $region6: #{tpu_custom_call.1} parent=1 // loop_footer
      %s18 = sadd.s32 1, %s14
    $region7: #{tpu_custom_call.1} parent=1 // loop_footer_branch
      %13 = sbr.rel target = $region3
    $region8: #{tpu_custom_call.1} parent=1 // loop_exit
      _
    %520 = vsyncpa [#allocation3], 1
    %s521 = scalar_lea.sflag [#allocation3], 1
    %522 = vsyncpa %s521, 1
    %523 = vsyncpa [#allocation4], 1
    %s524 = scalar_lea.sflag [#allocation4], 1
    %525 = vsyncpa %s524, 1

</llo_original>
